<compile_context>
chip_gen: v6e
topology: v6e:2x2x1
jax: 0.10.0
libtpu: 0.0.40
codegen_flags: <defaults>
</compile_context>

<pallas_src>
import functools

import jax
import jax.numpy as jnp
from jax.experimental import pallas as pl
from jax.experimental.pallas import tpu as pltpu

EPS = 1e-5  # nn.InstanceNorm2d default eps


def _round_up(x, m):
    return (x + m - 1) // m * m


def _make_kernel(k, wp, hwp, inv_hw, eps, b_step):
    kk = k * k

    def kernel(x_ref, w_ref, params_ref, mask_ref, o_ref):
        # x_ref:      (B, Cin, Lin)           bf16  flattened reflection-padded image
        # w_ref:      (Cout_pad, k*k*Cin)     bf16  fused per-tap weights
        # params_ref: (2, Cout_pad, 1)        f32   [gamma, beta]
        # mask_ref:   (1, hwp)                f32   1.0 where a wide column is real
        # o_ref:      (B, Cout_pad, hwp)      bf16  conv + IN + ReLU, wide-row layout
        w = w_ref[...]                      # hoisted: grid-invariant operands
        gamma = params_ref[0]               # (Cout_pad, 1)
        beta = params_ref[1]
        m = mask_ref[...]                   # (1, hwp)

        # Short unrolled sample loop (b_step <= 4) to amortize grid-step cost.
        for b in range(b_step):
            xb = x_ref[b]                   # (Cin, Lin) bf16, no upcast

            # Fused im2col-on-lanes: tap (di, dj) is a static lane offset
            # di*wp + dj; concatenate the k*k shifted bf16 slices along
            # sublanes -> contraction axis K = k*k*Cin for a single MXU dot.
            rhs = jnp.concatenate(
                [xb[:, (t // k) * wp + (t % k):(t // k) * wp + (t % k) + hwp]
                 for t in range(kk)],
                axis=0)                     # (k*k*Cin, hwp) bf16

            acc = jnp.dot(w, rhs,
                          preferred_element_type=jnp.float32)  # (Cout_pad, hwp) f32

            # InstanceNorm stats on the PRE-BIAS accumulator (bias cancels in
            # mean subtraction; variance is bias-invariant).  Masked so padded
            # wide columns (col % Wp >= W) do not contribute.  Mask multiply
            # stays out of the epilogue path.
            am = acc * m
            s1 = jnp.sum(am, axis=1, keepdims=True)      # (Cout_pad, 1)
            s2 = jnp.sum(am * am, axis=1, keepdims=True)
            mean = s1 * inv_hw
            var = jnp.maximum(s2 * inv_hw - mean * mean, 0.0)

            # Affine folded into one FMA, then ReLU, stored as bf16.
            scale = gamma * jax.lax.rsqrt(var + eps)
            shift = beta - mean * scale
            o_ref[b] = jnp.maximum(acc * scale + shift, 0.0).astype(o_ref.dtype)

    return kernel


@functools.partial(jax.jit,
                   static_argnames=("kernel_size", "samples_per_step", "out_dtype"))
def conv_instance_relu(x, weight, bias, gamma, beta, *, kernel_size,
                       samples_per_step=None, out_dtype=jnp.bfloat16):
    """x: (N, Cin, H, W) NCHW.  Returns (N, Cout, H, W) in `out_dtype`.

    `bias` is accepted for signature parity with the PyTorch module but is
    mathematically a no-op: InstanceNorm subtracts the per-channel spatial
    mean, which absorbs a per-channel constant exactly.
    """
    del bias  # cancelled exactly by InstanceNorm's mean subtraction
    n, cin, h, w = x.shape
    cout = weight.shape[0]
    k = kernel_size
    kk = k * k
    if k % 2 != 1:
        # With even k, ReflectionPad2d(k//2) + VALID conv changes H/W.
        raise ValueError("conv_instance_relu requires an odd kernel_size")
    # TODO(synk): only the module defaults stride=1, conv padding=0 are handled.
    pad = k // 2
    hp, wp = h + 2 * pad, w + 2 * pad
    hw = h * w
    hwp = h * wp                                   # wide-row flattened output width
    cout_pad = _round_up(cout, 16)                 # bf16 sublane packing for output
    # Largest tap offset is (k-1)*wp + (k-1); round lane length up to 128.
    l_in = _round_up(hp * wp + (k - 1), 128)

    # Grid batching: amortize per-step overhead at tiny H*W, keep >=2 steps
    # (v7x megacore) when N > 1.
    if samples_per_step is None:
        samples_per_step = 1 if n <= 2 else min(4, max(1, n // 2))
    b_step = max(1, min(samples_per_step, n))
    n_pad = _round_up(n, b_step)

    # Reflection pad + row-major flatten (XLA glue, fused under jit).  bf16.
    xp = jnp.pad(x, ((0, 0), (0, 0), (pad, pad), (pad, pad)), mode="reflect")
    xflat = xp.reshape(n, cin, hp * wp)
    xflat = jnp.pad(xflat, ((0, n_pad - n), (0, 0), (0, l_in - hp * wp)))
    xflat = xflat.astype(jnp.bfloat16)

    # Fused weights: W_fused[o, (di*k+dj)*Cin + c] = weight[o, c, di, dj].
    w_fused = jnp.transpose(weight, (0, 2, 3, 1)).reshape(cout, kk * cin)
    w_fused = jnp.pad(w_fused, ((0, cout_pad - cout), (0, 0)))
    w_fused = w_fused.astype(jnp.bfloat16)

    # gamma / beta fused into one grid-invariant block (f32).
    params = jnp.stack([gamma, beta]).astype(jnp.float32)             # (2, Cout)
    params = jnp.pad(params, ((0, 0), (0, cout_pad - cout)))[:, :, None]

    # Valid-pixel mask for the wide layout: column index mod Wp < W.
    mask = ((jnp.arange(hwp) % wp) < w).astype(jnp.float32)[None, :]

    kernel = _make_kernel(k, wp, hwp, 1.0 / hw, EPS, b_step)

    # VMEM budget from actual block sizes (double-buffered) + live-value slack,
    # capped below the chip's physical VMEM (v7x-safe fallback).
    out_itemsize = jnp.dtype(out_dtype).itemsize
    x_block = b_step * cin * l_in * 2
    o_block = b_step * cout_pad * hwp * out_itemsize
    w_block = cout_pad * kk * cin * 2
    live = (kk * cin + 4 * cout_pad) * hwp * 4
    needed = 2 * (x_block + o_block + w_block) + live + (2 << 20)
    try:
        vmem_cap = int(pltpu.get_tpu_info().vmem_capacity_bytes)
    except Exception:
        vmem_cap = 64 << 20  # v7x physical floor
    vmem_limit = int(min(vmem_cap - (8 << 20), max(32 << 20, needed)))

    out_wide = pl.pallas_call(
        kernel,
        out_shape=jax.ShapeDtypeStruct((n_pad, cout_pad, hwp), out_dtype),
        grid_spec=pltpu.PrefetchScalarGridSpec(
            num_scalar_prefetch=0,
            grid=(n_pad // b_step,),
            in_specs=[
                pl.BlockSpec((b_step, cin, l_in), lambda i: (i, 0, 0)),
                pl.BlockSpec((cout_pad, kk * cin), lambda i: (0, 0)),
                pl.BlockSpec((2, cout_pad, 1), lambda i: (0, 0, 0)),
                pl.BlockSpec((1, hwp), lambda i: (0, 0)),
            ],
            out_specs=pl.BlockSpec((b_step, cout_pad, hwp), lambda i: (i, 0, 0)),
        ),
        compiler_params=pltpu.CompilerParams(
            dimension_semantics=("parallel",),
            vmem_limit_bytes=vmem_limit,
        ),
    )(xflat, w_fused, params, mask)

    # Wide layout (N_pad, Cout_pad, H*Wp) -> NCHW, dropping batch/channel/column
    # padding.  TODO(synk): consumers that accept the wide layout can skip this.
    return out_wide[:n].reshape(n, cout_pad, h, wp)[:, :cout, :, :w]


def _reference(x, weight, bias, gamma, beta, kernel_size):
    """Pure-JAX (XLA) reference for validation (keeps the explicit bias add)."""
    pad = kernel_size // 2
    xp = jnp.pad(x, ((0, 0), (0, 0), (pad, pad), (pad, pad)), mode="reflect")
    y = jax.lax.conv_general_dilated(
        xp, weight, window_strides=(1, 1), padding="VALID",
        dimension_numbers=("NCHW", "OIHW", "NCHW"),
        precision=jax.lax.Precision.HIGHEST)
    y = y + bias[None, :, None, None]
    mean = jnp.mean(y, axis=(2, 3), keepdims=True)
    var = jnp.mean((y - mean) ** 2, axis=(2, 3), keepdims=True)
    yn = (y - mean) * jax.lax.rsqrt(var + EPS)
    yn = yn * gamma[None, :, None, None] + beta[None, :, None, None]
    return jnp.maximum(yn, 0.0)


if __name__ == "__main__":
    # Small shapes consistent with the module: N=2, Cin=4, H=W=16, Cout=8, k=3.
    N, CIN, H, W = 2, 4, 16, 16
    COUT, K = 8, 3

    key = jax.random.PRNGKey(0)
    kx, kw, kb, kg, kbe = jax.random.split(key, 5)

    x = jax.random.normal(kx, (N, CIN, H, W), dtype=jnp.float32)
    weight = 0.1 * jax.random.normal(kw, (COUT, CIN, K, K), dtype=jnp.float32)
    bias = 0.1 * jax.random.normal(kb, (COUT,), dtype=jnp.float32)
    # InstanceNorm2d affine params (PyTorch init gamma=1, beta=0), perturbed so
    # the affine path is exercised.
    gamma = 1.0 + 0.05 * jax.random.normal(kg, (COUT,), dtype=jnp.float32)
    beta = 0.05 * jax.random.normal(kbe, (COUT,), dtype=jnp.float32)

    # The kernel feeds the MXU bf16 activations/weights (f32 accumulation).
    # Round the test inputs to bf16 up front so the f32 reference sees the same
    # values and the comparison isolates the kernel math, not the input cast.
    x = x.astype(jnp.bfloat16).astype(jnp.float32)
    weight = weight.astype(jnp.bfloat16).astype(jnp.float32)

    out = conv_instance_relu(x, weight, bias, gamma, beta, kernel_size=K)
    out = jax.block_until_ready(out)

    ref = _reference(x, weight, bias, gamma, beta, K)
    assert out.shape == (N, COUT, H, W), out.shape
    out32 = out.astype(jnp.float32)
    max_err = float(jnp.max(jnp.abs(out32 - ref)))
    # Math is done in f32; tolerance covers only the final bf16 output store.
    assert jnp.allclose(out32, ref, atol=2e-2, rtol=2e-2), max_err

    print("KERNEL_OK")
</pallas_src>

<mosaic_0001>
module attributes {stable_mosaic.version = 11 : i64} {
  func.func @kernel(%arg0: i32, %arg1: memref<1x4x384xbf16, #tpu.memory_space<vmem>>, %arg2: memref<16x36xbf16, #tpu.memory_space<vmem>>, %arg3: memref<2x16x1xf32, #tpu.memory_space<vmem>>, %arg4: memref<1x288xf32, #tpu.memory_space<vmem>>, %arg5: memref<1x16x288xbf16, #tpu.memory_space<vmem>>) attributes {dimension_semantics = [#tpu.dimension_semantics<parallel>], iteration_bounds = array<i64: 2>, scalar_prefetch = 0 : i64, scratch_operands = 0 : i64, tpu.core_type = #tpu.core_type<tc>, window_params = [{transform_indices = @transform_0, window_bounds = array<i64: 1, 4, 384>}, {pipeline_mode = #tpu.pipeline_mode<synchronous>, transform_indices = @transform_1, window_bounds = array<i64: 16, 36>}, {pipeline_mode = #tpu.pipeline_mode<synchronous>, transform_indices = @transform_2, window_bounds = array<i64: 2, 16, 1>}, {pipeline_mode = #tpu.pipeline_mode<synchronous>, transform_indices = @transform_3, window_bounds = array<i64: 1, 288>}, {transform_indices = @transform_4, window_bounds = array<i64: 1, 16, 288>}]} {
    %c0 = arith.constant 0 : index
    %c0_0 = arith.constant 0 : index
    %0 = vector.load %arg2[%c0, %c0_0] : memref<16x36xbf16, #tpu.memory_space<vmem>>, vector<16x36xbf16>
    %c0_1 = arith.constant 0 : index
    %c0_2 = arith.constant 0 : index
    %c0_3 = arith.constant 0 : index
    %1 = vector.load %arg3[%c0_1, %c0_2, %c0_3] : memref<2x16x1xf32, #tpu.memory_space<vmem>>, vector<1x16x1xf32>
    %2 = vector.shape_cast %1 : vector<1x16x1xf32> to vector<16x1xf32>
    %c1 = arith.constant 1 : index
    %c0_4 = arith.constant 0 : index
    %c0_5 = arith.constant 0 : index
    %3 = vector.load %arg3[%c1, %c0_4, %c0_5] : memref<2x16x1xf32, #tpu.memory_space<vmem>>, vector<1x16x1xf32>
    %4 = vector.shape_cast %3 : vector<1x16x1xf32> to vector<16x1xf32>
    %c0_6 = arith.constant 0 : index
    %c0_7 = arith.constant 0 : index
    %5 = vector.load %arg4[%c0_6, %c0_7] : memref<1x288xf32, #tpu.memory_space<vmem>>, vector<1x288xf32>
    %c0_8 = arith.constant 0 : index
    %c0_9 = arith.constant 0 : index
    %c0_10 = arith.constant 0 : index
    %6 = vector.load %arg1[%c0_8, %c0_9, %c0_10] : memref<1x4x384xbf16, #tpu.memory_space<vmem>>, vector<1x4x384xbf16>
    %7 = vector.shape_cast %6 : vector<1x4x384xbf16> to vector<4x384xbf16>
    %8 = vector.extract_strided_slice %7 {offsets = [0, 0], sizes = [4, 288], strides = [1, 1]} : vector<4x384xbf16> to vector<4x288xbf16>
    %9 = vector.extract_strided_slice %7 {offsets = [0, 1], sizes = [4, 288], strides = [1, 1]} : vector<4x384xbf16> to vector<4x288xbf16>
    %10 = vector.extract_strided_slice %7 {offsets = [0, 2], sizes = [4, 288], strides = [1, 1]} : vector<4x384xbf16> to vector<4x288xbf16>
    %11 = vector.extract_strided_slice %7 {offsets = [0, 18], sizes = [4, 288], strides = [1, 1]} : vector<4x384xbf16> to vector<4x288xbf16>
    %12 = vector.extract_strided_slice %7 {offsets = [0, 19], sizes = [4, 288], strides = [1, 1]} : vector<4x384xbf16> to vector<4x288xbf16>
    %13 = vector.extract_strided_slice %7 {offsets = [0, 20], sizes = [4, 288], strides = [1, 1]} : vector<4x384xbf16> to vector<4x288xbf16>
    %14 = vector.extract_strided_slice %7 {offsets = [0, 36], sizes = [4, 288], strides = [1, 1]} : vector<4x384xbf16> to vector<4x288xbf16>
    %15 = vector.extract_strided_slice %7 {offsets = [0, 37], sizes = [4, 288], strides = [1, 1]} : vector<4x384xbf16> to vector<4x288xbf16>
    %16 = vector.extract_strided_slice %7 {offsets = [0, 38], sizes = [4, 288], strides = [1, 1]} : vector<4x384xbf16> to vector<4x288xbf16>
    %17 = tpu.concatenate %8, %9, %10, %11, %12, %13, %14, %15, %16 in 0 : vector<4x288xbf16>, vector<4x288xbf16>, vector<4x288xbf16>, vector<4x288xbf16>, vector<4x288xbf16>, vector<4x288xbf16>, vector<4x288xbf16>, vector<4x288xbf16>, vector<4x288xbf16> -> vector<36x288xbf16>
    %cst = arith.constant dense<0.000000e+00> : vector<16x288xf32>
    %18 = tpu.matmul %0, %17, %cst {dimension_numbers = #tpu.dot_dimension_numbers<[1], [0], [0], [1], [0, 0, 1, 1], [], []>} : vector<16x36xbf16>, vector<36x288xbf16>, vector<16x288xf32> -> vector<16x288xf32>
    %19 = vector.broadcast %5 : vector<1x288xf32> to vector<16x288xf32>
    %20 = arith.mulf %18, %19 : vector<16x288xf32>
    %cst_11 = arith.constant dense<0.000000e+00> : vector<16xf32>
    %21 = vector.multi_reduction <add>, %20, %cst_11 [1] : vector<16x288xf32> to vector<16xf32>
    %22 = vector.shape_cast %21 : vector<16xf32> to vector<16x1xf32>
    %23 = arith.mulf %20, %20 : vector<16x288xf32>
    %cst_12 = arith.constant dense<0.000000e+00> : vector<16xf32>
    %24 = vector.multi_reduction <add>, %23, %cst_12 [1] : vector<16x288xf32> to vector<16xf32>
    %25 = vector.shape_cast %24 : vector<16xf32> to vector<16x1xf32>
    %cst_13 = arith.constant 3.906250e-03 : f32
    %26 = vector.broadcast %cst_13 : f32 to vector<16x1xf32>
    %27 = arith.mulf %22, %26 : vector<16x1xf32>
    %cst_14 = arith.constant 3.906250e-03 : f32
    %28 = vector.broadcast %cst_14 : f32 to vector<16x1xf32>
    %29 = arith.mulf %25, %28 : vector<16x1xf32>
    %30 = arith.mulf %27, %27 : vector<16x1xf32>
    %31 = arith.subf %29, %30 : vector<16x1xf32>
    %cst_15 = arith.constant 0.000000e+00 : f32
    %32 = vector.broadcast %cst_15 : f32 to vector<16x1xf32>
    %33 = arith.maximumf %31, %32 : vector<16x1xf32>
    %cst_16 = arith.constant 9.99999974E-6 : f32
    %34 = vector.broadcast %cst_16 : f32 to vector<16x1xf32>
    %35 = arith.addf %33, %34 : vector<16x1xf32>
    %36 = math.rsqrt %35 : vector<16x1xf32>
    %37 = arith.mulf %2, %36 : vector<16x1xf32>
    %38 = arith.mulf %27, %37 : vector<16x1xf32>
    %39 = arith.subf %4, %38 : vector<16x1xf32>
    %40 = vector.broadcast %37 : vector<16x1xf32> to vector<16x288xf32>
    %41 = arith.mulf %18, %40 : vector<16x288xf32>
    %42 = vector.broadcast %39 : vector<16x1xf32> to vector<16x288xf32>
    %43 = arith.addf %41, %42 : vector<16x288xf32>
    %cst_17 = arith.constant 0.000000e+00 : f32
    %44 = vector.broadcast %cst_17 : f32 to vector<16x288xf32>
    %45 = arith.maximumf %43, %44 : vector<16x288xf32>
    %46 = arith.truncf %45 : vector<16x288xf32> to vector<16x288xbf16>
    %c0_18 = arith.constant 0 : index
    %c0_19 = arith.constant 0 : index
    %c0_20 = arith.constant 0 : index
    %47 = vector.load %arg5[%c0_18, %c0_19, %c0_20] : memref<1x16x288xbf16, #tpu.memory_space<vmem>>, vector<1x16x288xbf16>
    %48 = vector.shape_cast %47 : vector<1x16x288xbf16> to vector<16x288xbf16>
    %49 = vector.shape_cast %46 : vector<16x288xbf16> to vector<1x16x288xbf16>
    tpu.vector_store %arg5[%c0_18, %c0_19, %c0_20], %49 {strides = array<i32>} : memref<1x16x288xbf16, #tpu.memory_space<vmem>>, vector<1x16x288xbf16>,
    return
  }
  func.func @transform_0(%arg0: i32) -> (i32, i32, i32) {
    %c0_i32 = arith.constant 0 : i32
    %c0_i32_0 = arith.constant 0 : i32
    %c0_i32_1 = arith.constant 0 : i32
    return %arg0, %c0_i32, %c0_i32_0 : i32, i32, i32
  }
  func.func @transform_1(%arg0: i32) -> (i32, i32) {
    %c0_i32 = arith.constant 0 : i32
    %c0_i32_0 = arith.constant 0 : i32
    %c0_i32_1 = arith.constant 0 : i32
    return %c0_i32, %c0_i32_0 : i32, i32
  }
  func.func @transform_2(%arg0: i32) -> (i32, i32, i32) {
    %c0_i32 = arith.constant 0 : i32
    %c0_i32_0 = arith.constant 0 : i32
    %c0_i32_1 = arith.constant 0 : i32
    %c0_i32_2 = arith.constant 0 : i32
    return %c0_i32, %c0_i32_0, %c0_i32_1 : i32, i32, i32
  }
  func.func @transform_3(%arg0: i32) -> (i32, i32) {
    %c0_i32 = arith.constant 0 : i32
    %c0_i32_0 = arith.constant 0 : i32
    %c0_i32_1 = arith.constant 0 : i32
    return %c0_i32, %c0_i32_0 : i32, i32
  }
  func.func @transform_4(%arg0: i32) -> (i32, i32, i32) {
    %c0_i32 = arith.constant 0 : i32
    %c0_i32_0 = arith.constant 0 : i32
    %c0_i32_1 = arith.constant 0 : i32
    return %arg0, %c0_i32, %c0_i32_0 : i32, i32, i32
  }
}

</mosaic_0001>

<llo_original>
// kernel: conv_instance_relu.1
$region0: #{conv_instance_relu.1}
  #allocation0 [shape = 'u32[]', space=smem, size = 0x4, offset = 0x4, fixed_abs, tag = 'smem constant byte address 0x4 - core index']
  #allocation1 [shape = 'u32[144,128]{1,0:T(1,128)}', space=vmem, size = 0x12000, scoped, tag = 'internal scratch']
  %s0 = inlined_call_operand.vmem [shape: bf16[2,4,384], index: 0, kind: input, shape index: {}]
  %s1 = inlined_call_operand.vmem [shape: bf16[16,36], index: 1, kind: input, shape index: {}]
  %s2 = inlined_call_operand.vmem [shape: f32[2,16,1], index: 2, kind: input, shape index: {}]
  %s3 = inlined_call_operand.vmem [shape: f32[1,288], index: 3, kind: input, shape index: {}]
  %s4 = inlined_call_operand.vmem [shape: bf16[2,16,288], index: 4, kind: output, shape index: {}]
  %s5 = sld [smem:[#allocation0]]
  $region49: #{conv_instance_relu.1} parent=0
    _
  %s7 = ssub.s32 1, %s5
  %s8 = scalar_select 0, %s7, %s5
  loop: start=0, step=1, limit=4
  $region2: #{conv_instance_relu.1} parent=0 // loop_pre_header
    _
  $region3: #{conv_instance_relu.1} parent=0 // loop_header
    %s10 = sphi 0, %s14
    %p11 = scmp.ge.s32.totalorder %s10, 4
    %s20 = sphi 0, %s22
    %s23 = sphi 0, %s20
    %s24 = sphi 0, %s23
    %s40 = sphi 0, %s24
    %s44 = sphi 0, %s44
    %s46 = sphi 0, %s44
    %s47 = sphi 0, %s46
    %s61 = sphi 0, %s47
    %s65 = sphi 0, %s65
    %s67 = sphi 0, %s65
    %s68 = sphi 0, %s67
    %s82 = sphi 0, %s68
    %s86 = sphi 0, %s86
    %s88 = sphi 0, %s86
    %s89 = sphi 0, %s88
    %s103 = sphi 0, %s89
    %s109 = sphi 0, %s111
    %s112 = sphi 0, %s109
    %s113 = sphi 0, %s112
    %s129 = sphi 0, %s113
  $region4: #{conv_instance_relu.1} parent=0 // loop_header_branch
    %13 = sbr.rel (%p11) target = $region8
  $region5: #{conv_instance_relu.1} parent=0 // loop_body
    %s15 = ssub.s32 %s10, 1
    %s16 = ssub.s32 %s10, 2
    %s17 = sadd.s32 %s10, 1
    %s18 = ssub.s32 %s10, %s17
    %p19 = scmp.eq.s32.totalorder %s18, 0
    %s21 = sadd.s32 %s20, 1
    %s22 = scalar_select %p19, %s20, %s21
    %p25 = pneg %p19
    %p26 = scmp.eq.s32.totalorder %s10, 1
    %p27 = por %p25, %p26
    %p28 = scmp.ne.s32.totalorder %s20, %s23
    %p29 = scmp.eq.s32.totalorder %s10, 0
    %p30 = por %p28, %p29
    %p31 = scmp.ne.s32.totalorder %s20, %s23
    %p32 = scmp.eq.s32.totalorder %s15, 1
    %p33 = por %p31, %p32
    %p34 = scmp.ne.s32.totalorder %s23, %s24
    %p35 = scmp.eq.s32.totalorder %s15, 0
    %p36 = por %p34, %p35
    %p37 = scmp.ne.s32.totalorder %s23, %s24
    %p38 = scmp.eq.s32.totalorder %s16, 1
    %p39 = por %p37, %p38
    %p41 = scmp.ne.s32.totalorder %s24, %s40
    %p42 = scmp.eq.s32.totalorder %s16, 0
    %p43 = por %p41, %p42
    %s45 = sadd.s32 %s44, 1
    %p48 = scmp.eq.s32.totalorder %s10, 1
    %p49 = scmp.ne.s32.totalorder %s44, %s46
    %p50 = scmp.eq.s32.totalorder %s10, 0
    %p51 = por %p49, %p50
    %p52 = scmp.ne.s32.totalorder %s44, %s46
    %p53 = scmp.eq.s32.totalorder %s15, 1
    %p54 = por %p52, %p53
    %p55 = scmp.ne.s32.totalorder %s46, %s47
    %p56 = scmp.eq.s32.totalorder %s15, 0
    %p57 = por %p55, %p56
    %p58 = scmp.ne.s32.totalorder %s46, %s47
    %p59 = scmp.eq.s32.totalorder %s16, 1
    %p60 = por %p58, %p59
    %p62 = scmp.ne.s32.totalorder %s47, %s61
    %p63 = scmp.eq.s32.totalorder %s16, 0
    %p64 = por %p62, %p63
    %s66 = sadd.s32 %s65, 1
    %p69 = scmp.eq.s32.totalorder %s10, 1
    %p70 = scmp.ne.s32.totalorder %s65, %s67
    %p71 = scmp.eq.s32.totalorder %s10, 0
    %p72 = por %p70, %p71
    %p73 = scmp.ne.s32.totalorder %s65, %s67
    %p74 = scmp.eq.s32.totalorder %s15, 1
    %p75 = por %p73, %p74
    %p76 = scmp.ne.s32.totalorder %s67, %s68
    %p77 = scmp.eq.s32.totalorder %s15, 0
    %p78 = por %p76, %p77
    %p79 = scmp.ne.s32.totalorder %s67, %s68
    %p80 = scmp.eq.s32.totalorder %s16, 1
    %p81 = por %p79, %p80
    %p83 = scmp.ne.s32.totalorder %s68, %s82
    %p84 = scmp.eq.s32.totalorder %s16, 0
    %p85 = por %p83, %p84
    %s87 = sadd.s32 %s86, 1
    %p90 = scmp.eq.s32.totalorder %s10, 1
    %p91 = scmp.ne.s32.totalorder %s86, %s88
    %p92 = scmp.eq.s32.totalorder %s10, 0
    %p93 = por %p91, %p92
    %p94 = scmp.ne.s32.totalorder %s86, %s88
    %p95 = scmp.eq.s32.totalorder %s15, 1
    %p96 = por %p94, %p95
    %p97 = scmp.ne.s32.totalorder %s88, %s89
    %p98 = scmp.eq.s32.totalorder %s15, 0
    %p99 = por %p97, %p98
    %p100 = scmp.ne.s32.totalorder %s88, %s89
    %p101 = scmp.eq.s32.totalorder %s16, 1
    %p102 = por %p100, %p101
    %p104 = scmp.ne.s32.totalorder %s89, %s103
    %p105 = scmp.eq.s32.totalorder %s16, 0
    %p106 = por %p104, %p105
    %s107 = ssub.s32 %s10, %s17
    %p108 = scmp.eq.s32.totalorder %s107, 0
    %s110 = sadd.s32 %s109, 1
    %s111 = scalar_select %p108, %s109, %s110
    %p114 = pneg %p108
    %p115 = scmp.eq.s32.totalorder %s10, 1
    %p116 = por %p114, %p115
    %p117 = scmp.ne.s32.totalorder %s109, %s112
    %p118 = scmp.eq.s32.totalorder %s10, 0
    %p119 = por %p117, %p118
    %p120 = scmp.ne.s32.totalorder %s109, %s112
    %p121 = scmp.eq.s32.totalorder %s15, 1
    %p122 = por %p120, %p121
    %p123 = scmp.ne.s32.totalorder %s112, %s113
    %p124 = scmp.eq.s32.totalorder %s15, 0
    %p125 = por %p123, %p124
    %p126 = scmp.ne.s32.totalorder %s112, %s113
    %p127 = scmp.eq.s32.totalorder %s16, 1
    %p128 = por %p126, %p127
    %p130 = scmp.ne.s32.totalorder %s113, %s129
    %p131 = scmp.eq.s32.totalorder %s16, 0
    %p132 = por %p130, %p131
    %p133 = scmp.le.s32.totalorder 1, %s10
    %p134 = scmp.lt.s32.totalorder %s10, 3
    %p135 = pnand %p133, %p134
    %p136 = pneg %p135
    // Predicated region
    $region9: #{conv_instance_relu.1} parent=5 // pred_check
      _
    $region10: #{conv_instance_relu.1} parent=5 // pred_check_branch
      %138 = sbr.rel (%p135) target = $region12
    $region11: #{conv_instance_relu.1} parent=5 // pred_region
      %s139 = ssub.s32 %s10, 1
      // Predicated region
      $region13: #{conv_instance_relu.1} parent=11 // pred_check
        %p140 = pneg %p57
      $region14: #{conv_instance_relu.1} parent=11 // pred_check_branch
        %142 = sbr.rel (%p140) target = $region16
      $region15: #{conv_instance_relu.1} parent=11 // pred_region
        _
      $region16: #{conv_instance_relu.1} parent=11 // pred_fallthru
        _
      // Predicated region
      $region17: #{conv_instance_relu.1} parent=11 // pred_check
        %p143 = pneg %p78
      $region18: #{conv_instance_relu.1} parent=11 // pred_check_branch
        %145 = sbr.rel (%p143) target = $region20
      $region19: #{conv_instance_relu.1} parent=11 // pred_region
        _
      $region20: #{conv_instance_relu.1} parent=11 // pred_fallthru
        _
      // Predicated region
      $region21: #{conv_instance_relu.1} parent=11 // pred_check
        %p146 = pneg %p99
      $region22: #{conv_instance_relu.1} parent=11 // pred_check_branch
        %148 = sbr.rel (%p146) target = $region24
      $region23: #{conv_instance_relu.1} parent=11 // pred_region
        _
      $region24: #{conv_instance_relu.1} parent=11 // pred_fallthru
        _
    $region12: #{conv_instance_relu.1} parent=5 // pred_fallthru
      _
    %p149 = scmp.lt.s32.totalorder %s10, 2
    // Predicated region
    $region25: #{conv_instance_relu.1} parent=5 // pred_check
      %p150 = pneg %p149
    $region26: #{conv_instance_relu.1} parent=5 // pred_check_branch
      %152 = sbr.rel (%p150) target = $region28
    $region27: #{conv_instance_relu.1} parent=5 // pred_region
      // Predicated region
      $region29: #{conv_instance_relu.1} parent=27 // pred_check
        %p153 = pneg %p30
      $region30: #{conv_instance_relu.1} parent=27 // pred_check_branch
        %155 = sbr.rel (%p153) target = $region32
      $region31: #{conv_instance_relu.1} parent=27 // pred_region
        %p156 = scmp.lt.s32.totalorder %s10, 1
        %s157 = scalar_select %p156, %s10, 1
        %s158 = smul.addr %s157, 3
        %s159 = smul.addr %s158, 2
        %s160 = scalar_lea.vmem %s0, %s159
      $region32: #{conv_instance_relu.1} parent=27 // pred_fallthru
        _
    $region28: #{conv_instance_relu.1} parent=5 // pred_fallthru
      _
    %p161 = scmp.le.s32.totalorder 1, %s10
    %p162 = scmp.lt.s32.totalorder %s10, 3
    %p163 = pnand %p161, %p162
    %p164 = pneg %p163
    // Predicated region
    $region33: #{conv_instance_relu.1} parent=5 // pred_check
      _
    $region34: #{conv_instance_relu.1} parent=5 // pred_check_branch
      %166 = sbr.rel (%p163) target = $region36
    $region35: #{conv_instance_relu.1} parent=5 // pred_region
      %s167 = ssub.s32 %s10, 1
      %p168 = scmp.lt.s32.totalorder %s15, 1
      %s169 = scalar_select %p168, %s15, 1
      %s170 = smul.addr %s169, 3
      %s171 = smul.addr %s170, 2
      %s172 = scalar_lea.vmem %s0, %s171
      %p173 = pneg %p36
      %p174 = pneg %p33
      %p175 = pneg %p57
      %p176 = pneg %p54
      %p177 = pneg %p78
      %p178 = pneg %p75
      %p179 = pneg %p99
      %p180 = pneg %p96
      %p181 = pneg %p125
      %p182 = pneg %p122
      %p183 = scmp.lt.s32.totalorder %s15, 1
      %s184 = scalar_select %p183, %s15, 1
      %s185 = smul.addr %s184, 6
      %s186 = smul.addr %s185, 4
      %s187 = scalar_lea.vmem %s4, %s186
      %p188 = scmp.lt.s32.totalorder %s15, 1
      %s189 = scalar_select %p188, %s15, 1
      %s190 = smul.addr %s189, 3
      %s191 = smul.addr %s190, 2
      %s192 = scalar_lea.vmem %s0, %s191
      %p193 = scmp.lt.s32.totalorder %s15, 1
      %s194 = scalar_select %p193, %s15, 1
      %s195 = smul.addr %s194, 6
      %s196 = smul.addr %s195, 4
      %s197 = scalar_lea.vmem %s4, %s196
      %v199 = vld [vmem:[%s1] sm:$0xf]
      %v200 = vld [vmem:[%s1 + $0x4] sm:$0xf]
      %v201 = vld [vmem:[%s2] sm:$0xff]
      %v202 = vld [vmem:[%s2 + $0x8] sm:$0xff]
      %s203 = scalar_lea.vmem %s2, 16
      %v204 = vld [vmem:[%s203] sm:$0xff]
      %v205 = vld [vmem:[%s203 + $0x8] sm:$0xff]
      %v206 = vld [vmem:[%s3] sm:$0x7]
      %v207 = vld [vmem:[%s192] sm:$0x3f]
      %v209 = vcombine.high %v207, %v207
      %v211 = vunpack.c.l.s4 1983009808
      %v212 = vunpack.c.0.s8 %v211
      %v213 = vlaneseq
      %v214 = vshrl.u32 %v213, 7
      %v215 = vsub.s32 %v212, %v214
      %v216 = vrot.slane %v207, %v215
      %v218 = vunpack.c.l.s4 1983009808
      %v219 = vunpack.c.0.s8 %v218
      %v220 = vlaneseq
      %v221 = vshrl.u32 %v220, 7
      %v222 = vsub.s32 %v219, %v221
      %v223 = vrot.slane %v209, %v222
      %v224 = vcombine.high %v216, %v216
      %v225 = vcombine.low %v207, %v207
      %v227 = vunpack.c.l.s4 1983009808
      %v228 = vunpack.c.0.s8 %v227
      %v229 = vlaneseq
      %v230 = vshrl.u32 %v229, 7
      %v231 = vsub.s32 %v228, %v230
      %v232 = vrot.slane %v225, %v231
      %v233 = vcombine.high %v232, %v232
      %234 = vrot.lane.b32.xlu0 %v232, 127
      %v235 = vpop.permute.xlu0 %234
      %236 = vrot.lane.b32.xlu0 %v233, 127
      %v237 = vpop.permute.xlu0 %236
      %238 = vrot.lane.b32.xlu0 %v216, 127
      %v239 = vpop.permute.xlu0 %238
      %vm240 = vcmask 1039360
      %v241 = vsel %vm240, %v235, %v237
      %v242 = vsel %vm240, %v237, %v239
      %v243 = vcombine.low %v216, %v216
      %v244 = vcombine.low %v223, %v223
      %245 = vrot.lane.b32.xlu0 %v243, 126
      %v246 = vpop.permute.xlu0 %245
      %247 = vrot.lane.b32.xlu0 %v216, 126
      %v248 = vpop.permute.xlu0 %247
      %249 = vrot.lane.b32.xlu0 %v244, 126
      %v250 = vpop.permute.xlu0 %249
      %vm251 = vcmask 1031168
      %v252 = vsel %vm251, %v246, %v248
      %v253 = vsel %vm251, %v248, %v250
      %v254 = vcombine.low %v232, %v232
      %255 = vrot.lane.b32.xlu0 %v254, 110
      %v256 = vpop.permute.xlu0 %255
      %257 = vrot.lane.b32.xlu0 %v232, 110
      %v258 = vpop.permute.xlu0 %257
      %259 = vrot.lane.b32.xlu0 %v243, 110
      %v260 = vpop.permute.xlu0 %259
      %vm261 = vcmask 900096
      %v262 = vsel %vm261, %v256, %v258
      %v263 = vsel %vm261, %v258, %v260
      %264 = vrot.lane.b32.xlu0 %v216, 109
      %v265 = vpop.permute.xlu0 %264
      %266 = vrot.lane.b32.xlu0 %v224, 109
      %v267 = vpop.permute.xlu0 %266
      %268 = vrot.lane.b32.xlu0 %v223, 109
      %v269 = vpop.permute.xlu0 %268
      %vm270 = vcmask 891904
      %v271 = vsel %vm270, %v265, %v267
      %v272 = vsel %vm270, %v267, %v269
      %273 = vrot.lane.b32.xlu0 %v232, 108
      %v274 = vpop.permute.xlu0 %273
      %275 = vrot.lane.b32.xlu0 %v233, 108
      %v276 = vpop.permute.xlu0 %275
      %277 = vrot.lane.b32.xlu0 %v216, 108
      %v278 = vpop.permute.xlu0 %277
      %vm279 = vcmask 883712
      %v280 = vsel %vm279, %v274, %v276
      %v281 = vsel %vm279, %v276, %v278
      %282 = vrot.lane.b32.xlu0 %v243, 92
      %v283 = vpop.permute.xlu0 %282
      %284 = vrot.lane.b32.xlu0 %v216, 92
      %v285 = vpop.permute.xlu0 %284
      %286 = vrot.lane.b32.xlu0 %v244, 92
      %v287 = vpop.permute.xlu0 %286
      %vm288 = vcmask 752640
      %v289 = vsel %vm288, %v283, %v285
      %v290 = vsel %vm288, %v285, %v287
      %291 = vrot.lane.b32.xlu0 %v254, 91
      %v292 = vpop.permute.xlu0 %291
      %293 = vrot.lane.b32.xlu0 %v232, 91
      %v294 = vpop.permute.xlu0 %293
      %295 = vrot.lane.b32.xlu0 %v243, 91
      %v296 = vpop.permute.xlu0 %295
      %vm297 = vcmask 744448
      %v298 = vsel %vm297, %v292, %v294
      %v299 = vsel %vm297, %v294, %v296
      %300 = vrot.lane.b32.xlu0 %v216, 90
      %v301 = vpop.permute.xlu0 %300
      %302 = vrot.lane.b32.xlu0 %v224, 90
      %v303 = vpop.permute.xlu0 %302
      %304 = vrot.lane.b32.xlu0 %v223, 90
      %v305 = vpop.permute.xlu0 %304
      %vm306 = vcmask 736256
      %v307 = vsel %vm306, %v301, %v303
      %v308 = vsel %vm306, %v303, %v305
      %vm309 = vcmask 1041408
      %v312 = vsel %vm309, %v216, %v241
      %v315 = vsel %vm309, %v224, %v242
      %v318 = vsel %vm309, %v223, %v239
      %vm319 = vcmask 1043456
      %v321 = vsel %vm319, %v312, %v252
      %v323 = vsel %vm319, %v315, %v253
      %v325 = vsel %vm319, %v318, %v250
      %vm326 = vcmask 1045504
      %v328 = vsel %vm326, %v321, %v262
      %v331 = vsel %vm326, %v323, %v263
      %v334 = vsel %vm326, %v325, %v260
      %v338 = vsel %vm309, %v271, %v280
      %v341 = vsel %vm309, %v272, %v281
      %v344 = vsel %vm309, %v269, %v278
      %v346 = vsel %vm319, %v338, %v289
      %v348 = vsel %vm319, %v341, %v290
      %v350 = vsel %vm319, %v344, %v287
      %v352 = vsel %vm326, %v346, %v298
      %v355 = vsel %vm326, %v348, %v299
      %v358 = vsel %vm326, %v350, %v296
      %v362 = vunpack.c.l.b16 %v199
      %v363 = vunpack.c.l.b16 %v200
      %v364 = vpack.c.b16 %v363, %v362
      %vm365 = vcmask 293888
      %v367 = vsel %vm365, %v364, 0
      %v370 = vsel %vm309, %v307, 0
      %v373 = vsel %vm309, %v308, 0
      %v376 = vsel %vm309, %v305, 0
      %378 = vmatprep.subr.bf16.mxu0 0
      %379 = vmatpush1.bf16.msra.mxu0 0
      %380 = vmatprep.subr.bf16.mxu0 0
      %381 = vmatpush1.bf16.msra.mxu0 0
      %382 = vmatprep.subr.bf16.mxu0 0
      %383 = vmatpush1.bf16.msra.mxu0 0
      %384 = vmatprep.subr.bf16.mxu0 0
      %385 = vmatpush1.bf16.msra.mxu0 0
      %386 = vmatprep.subr.bf16.mxu0 0
      %387 = vmatpush1.bf16.msra.mxu0 0
      %388 = vmatprep.subr.bf16.mxu0 %v373
      %389 = vmatpush1.bf16.msra.mxu0 %v370
      %390 = vmatprep.subr.bf16.mxu0 %v355
      %391 = vmatpush1.bf16.msra.mxu0 %v352
      %392 = vmatprep.subr.bf16.mxu0 %v331
      %393 = vmatpush1.bf16.msra.mxu0 %v328
      %394 = vmatprep.subr.bf16.mxu0 0
      %395 = vmatpush2.bf16.msra.mxu0 0
      %396 = vmatprep.subr.bf16.mxu0 0
      %397 = vmatpush2.bf16.msra.mxu0 0
      %398 = vmatprep.subr.bf16.mxu0 0
      %399 = vmatpush2.bf16.msra.mxu0 0
      %400 = vmatprep.subr.bf16.mxu0 0
      %401 = vmatpush2.bf16.msra.mxu0 0
      %402 = vmatprep.subr.bf16.mxu0 0
      %403 = vmatpush2.bf16.msra.mxu0 0
      %404 = vmatprep.subr.bf16.mxu0 0
      %405 = vmatpush2.bf16.msra.mxu0 0
      %406 = vmatprep.subr.bf16.mxu0 0
      %407 = vmatpush2.bf16.msra.mxu0 0
      %408 = vmatprep.subr.bf16.mxu0 0
      %409 = vmatpush2.bf16.msra.mxu0 0
      %410 = vmatprep.mubr.bf16.mxu0 0
      %411 = vmatmul.mubr.bf16.gmra.mxu0 %v367
      %v412 = vpop.f32.mrf.mxu0
      %v413 = vadd.f32 0.0, %v412
      %v414 = vpop.f32.mrf.mxu0
      %v415 = vadd.f32 0.0, %v414
      %v416 = vpop.f32.mrf.mxu0
      %v417 = vadd.f32 0.0, %v416
      %v418 = vpop.f32.mrf.mxu0
      %v419 = vadd.f32 0.0, %v418
      %420 = vdwg.mxu0
      %421 = vmatprep.subr.bf16.mxu0 0
      %422 = vmatpush1.bf16.msra.mxu0 0
      %423 = vmatprep.subr.bf16.mxu0 0
      %424 = vmatpush1.bf16.msra.mxu0 0
      %425 = vmatprep.subr.bf16.mxu0 0
      %426 = vmatpush1.bf16.msra.mxu0 0
      %427 = vmatprep.subr.bf16.mxu0 0
      %428 = vmatpush1.bf16.msra.mxu0 0
      %429 = vmatprep.subr.bf16.mxu0 0
      %430 = vmatpush1.bf16.msra.mxu0 0
      %431 = vmatprep.subr.bf16.mxu0 0
      %432 = vmatpush1.bf16.msra.mxu0 %v376
      %433 = vmatprep.subr.bf16.mxu0 0
      %434 = vmatpush1.bf16.msra.mxu0 %v358
      %435 = vmatprep.subr.bf16.mxu0 0
      %436 = vmatpush1.bf16.msra.mxu0 %v334
      %437 = vmatprep.subr.bf16.mxu0 0
      %438 = vmatpush2.bf16.msra.mxu0 0
      %439 = vmatprep.subr.bf16.mxu0 0
      %440 = vmatpush2.bf16.msra.mxu0 0
      %441 = vmatprep.subr.bf16.mxu0 0
      %442 = vmatpush2.bf16.msra.mxu0 0
      %443 = vmatprep.subr.bf16.mxu0 0
      %444 = vmatpush2.bf16.msra.mxu0 0
      %445 = vmatprep.subr.bf16.mxu0 0
      %446 = vmatpush2.bf16.msra.mxu0 0
      %447 = vmatprep.subr.bf16.mxu0 0
      %448 = vmatpush2.bf16.msra.mxu0 0
      %449 = vmatprep.subr.bf16.mxu0 0
      %450 = vmatpush2.bf16.msra.mxu0 0
      %451 = vmatprep.subr.bf16.mxu0 0
      %452 = vmatpush2.bf16.msra.mxu0 0
      %453 = vmatprep.mubr.bf16.mxu0 0
      %454 = vmatmul.mubr.bf16.gmra.mxu0 %v367
      %v455 = vpop.f32.mrf.mxu0
      %v456 = vadd.f32 0.0, %v455
      %v457 = vpop.f32.mrf.mxu0
      %v458 = vpop.f32.mrf.mxu0
      %v459 = vadd.f32 0.0, %v458
      %v460 = vpop.f32.mrf.mxu0
      %461 = vdwg.mxu0
      %v463 = vlaneseq
      %v464 = vshrl.u32 %v463, 7
      %v465 = vsub.s32 0, %v464
      %v466 = vrot.slane %v206, %v465
      %v467 = vlaneseq
      %v468 = vshrl.u32 %v467, 7
      %v469 = vsub.s32 1, %v468
      %v470 = vrot.slane %v206, %v469
      %v471 = vlaneseq
      %v472 = vshrl.u32 %v471, 7
      %v473 = vsub.s32 2, %v472
      %v474 = vrot.slane %v206, %v473
      %v478 = vmul.f32 %v413, %v466
      %v479 = vmul.f32 %v415, %v470
      %v480 = vmul.f32 %v456, %v474
      %v481 = vmul.f32 %v417, %v466
      %v482 = vmul.f32 %v419, %v470
      %v483 = vmul.f32 %v459, %v474
      %v484 = vadd.f32 %v478, %v479
      %vm485 = vcmask 261120
      %v486 = vsel %vm485, %v480, 0.0
      %v487 = vadd.f32 %v484, %v486
      %488 = vadd.xlane.f32.xlu0 %v487
      %v489 = vpop.xlane.xlu0 %488
      %v490 = vadd.f32 %v481, %v482
      %v491 = vsel %vm485, %v483, 0.0
      %v492 = vadd.f32 %v490, %v491
      %493 = vadd.xlane.f32.xlu0 %v492
      %v494 = vpop.xlane.xlu0 %493
      %v495 = vmul.f32 %v478, %v478
      %v496 = vmul.f32 %v479, %v479
      %v497 = vmul.f32 %v480, %v480
      %v498 = vmul.f32 %v481, %v481
      %v499 = vmul.f32 %v482, %v482
      %v500 = vmul.f32 %v483, %v483
      %v501 = vadd.f32 %v495, %v496
      %v502 = vsel %vm485, %v497, 0.0
      %v503 = vadd.f32 %v501, %v502
      %504 = vadd.xlane.f32.xlu0 %v503
      %v505 = vpop.xlane.xlu0 %504
      %v506 = vadd.f32 %v498, %v499
      %v507 = vsel %vm485, %v500, 0.0
      %v508 = vadd.f32 %v506, %v507
      %509 = vadd.xlane.f32.xlu0 %v508
      %v510 = vpop.xlane.xlu0 %509
      %v511 = vmul.f32 %v489, 0.00390625
      %v512 = vmul.f32 %v494, 0.00390625
      %v513 = vmul.f32 %v505, 0.00390625
      %v514 = vmul.f32 %v510, 0.00390625
      %v515 = vmul.f32 %v511, %v511
      %v516 = vmul.f32 %v512, %v512
      %v517 = vsub.f32 %v513, %v515
      %v518 = vsub.f32 %v514, %v516
      %v519 = vmax.f32 %v517, 0.0
      %v520 = vmax.f32 %v518, 0.0
      %v521 = vadd.f32 %v519, 1e-05
      %v522 = vadd.f32 %v520, 1e-05
      %v523 = vrsqrt.pop %v521
      %v524 = vrsqrt.pop %v522
      %v525 = vmul.f32 %v201, %v523
      %v526 = vmul.f32 %v202, %v524
      %v527 = vmul.f32 %v511, %v525
      %v528 = vmul.f32 %v512, %v526
      %v529 = vsub.f32 %v204, %v527
      %v530 = vsub.f32 %v205, %v528
      %532 = vset.pattern.permute.xlu0 0
      %533 = vperm.xlu0 %532, %v525
      %v534 = vpop.permute.xlu0 %533
      %537 = vset.pattern.permute.xlu0 0
      %538 = vperm.xlu0 %537, %v526
      %v539 = vpop.permute.xlu0 %538
      %v541 = vmul.f32 %v413, %v534
      %v542 = vmul.f32 %v415, %v534
      %v543 = vmul.f32 %v456, %v534
      %v544 = vmul.f32 %v417, %v539
      %v545 = vmul.f32 %v419, %v539
      %v546 = vmul.f32 %v459, %v539
      %548 = vset.pattern.permute.xlu0 0
      %549 = vperm.xlu0 %548, %v529
      %v550 = vpop.permute.xlu0 %549
      %553 = vset.pattern.permute.xlu0 0
      %554 = vperm.xlu0 %553, %v530
      %v555 = vpop.permute.xlu0 %554
      %v557 = vadd.f32 %v541, %v550
      %v558 = vadd.f32 %v542, %v550
      %v559 = vadd.f32 %v543, %v550
      %v560 = vadd.f32 %v544, %v555
      %v561 = vadd.f32 %v545, %v555
      %v562 = vadd.f32 %v546, %v555
      %v563 = vmax.f32 %v557, 0.0
      %v564 = vmax.f32 %v558, 0.0
      %v565 = vmax.f32 %v559, 0.0
      %v566 = vmax.f32 %v560, 0.0
      %v567 = vmax.f32 %v561, 0.0
      %v568 = vmax.f32 %v562, 0.0
      %v569 = vpack.c.bf16 %v566, %v563
      %v570 = vpack.c.bf16 %v567, %v564
      %v571 = vpack.c.bf16 %v568, %v565
      %v575 = vunpack.c.l.b16 %v569
      %v576 = vunpack.c.l.b16 %v570
      %v577 = vunpack.c.l.b16 %v571
      %v578 = vunpack.c.h.b16 %v569
      %v579 = vunpack.c.h.b16 %v570
      %v580 = vunpack.c.h.b16 %v571
      %v581 = vpack.c.b16 %v576, %v575
      %v582 = vpack.c.b16 %v577, %v577
      %v583 = vpack.c.b16 %v579, %v578
      %v584 = vpack.c.b16 %v580, %v580
      %589 = vst [vmem:[%s197] sm:$0xff] %v581
      %vm590 = vcmask 257024
      %591 = vst.msk [vmem:[%s197 + $0x8] sm:$0xf] %vm590, %v582
      %592 = vst [vmem:[%s197 + $0xc] sm:$0xff] %v583
      %593 = vst.msk [vmem:[%s197 + $0x14] sm:$0xf] %vm590, %v584
      %p594 = scmp.lt.s32.totalorder %s15, 1
      %s595 = scalar_select %p594, %s15, 1
      %s596 = smul.addr %s595, 6
      %s597 = smul.addr %s596, 4
      %s598 = scalar_lea.vmem %s4, %s597
      // Predicated region
      $region37: #{conv_instance_relu.1} parent=35 // pred_check
        %p599 = pneg %p122
      $region38: #{conv_instance_relu.1} parent=35 // pred_check_branch
        %601 = sbr.rel (%p599) target = $region40
      $region39: #{conv_instance_relu.1} parent=35 // pred_region
        _
      $region40: #{conv_instance_relu.1} parent=35 // pred_fallthru
        _
    $region36: #{conv_instance_relu.1} parent=5 // pred_fallthru
      _
    %p602 = scmp.le.s32.totalorder 2, %s10
    // Predicated region
    $region41: #{conv_instance_relu.1} parent=5 // pred_check
      %p603 = pneg %p602
    $region42: #{conv_instance_relu.1} parent=5 // pred_check_branch
      %605 = sbr.rel (%p603) target = $region44
    $region43: #{conv_instance_relu.1} parent=5 // pred_region
      %s606 = ssub.s32 %s10, 2
      // Predicated region
      $region45: #{conv_instance_relu.1} parent=43 // pred_check
        %p607 = pneg %p128
      $region46: #{conv_instance_relu.1} parent=43 // pred_check_branch
        %609 = sbr.rel (%p607) target = $region48
      $region47: #{conv_instance_relu.1} parent=43 // pred_region
        %p610 = scmp.lt.s32.totalorder %s16, 1
        %s611 = scalar_select %p610, %s16, 1
        %s612 = smul.addr %s611, 6
        %s613 = smul.addr %s612, 4
        %s614 = scalar_lea.vmem %s4, %s613
      $region48: #{conv_instance_relu.1} parent=43 // pred_fallthru
        _
    $region44: #{conv_instance_relu.1} parent=5 // pred_fallthru
      _
  $region6: #{conv_instance_relu.1} parent=0 // loop_footer
    %s14 = sadd.s32 1, %s10
  $region7: #{conv_instance_relu.1} parent=0 // loop_footer_branch
    %9 = sbr.rel target = $region3
  $region8: #{conv_instance_relu.1} parent=0 // loop_exit
    _

</llo_original>
